<compile_context>
chip_gen: v6e
topology: v6e:2x2x1
jax: 0.10.0
libtpu: 0.0.40
codegen_flags: <defaults>
</compile_context>

<pallas_src>
import jax
import jax.numpy as jnp
from jax.experimental import pallas as pl
from jax.experimental.pallas import tpu as pltpu


def _round_up(v, m):
    return ((v + m - 1) // m) * m


def _choose_time_tile(L, max_pad, target):
    """Multiple-of-8 time tile, >= the causal history and <= ~target."""
    tl = min(_round_up(target, 8), _round_up(L, 8))
    return max(tl, _round_up(max_pad, 8), 8)


def _vmem_limit_bytes():
    """~75% of this chip generation's VMEM (capped at 96 MiB), safe fallback."""
    cap = None
    try:
        cap = getattr(pltpu.get_tpu_info(), "vmem_capacity_bytes", None)
    except Exception:
        cap = None
    if not cap:
        cap = 64 * 1024 * 1024                      # v7x-safe fallback
    return int(min(cap * 3 // 4, 96 * 1024 * 1024))


def _make_temporal_block_kernel(K, dilation, TL, has_downsample, per_tap):
    pad = (K - 1) * dilation

    def kernel(*refs):
        if has_downsample:
            x_ref, w_ref, b1_ref, wd_ref, bd_ref, out_ref, xbuf_ref = refs
        else:
            x_ref, w_ref, b1_ref, out_ref, xbuf_ref = refs
            wd_ref = bd_ref = None

        lt = pl.program_id(1)
        cin = xbuf_ref.shape[1]

        x = x_ref[0]                                 # (TL, Cin) current tile (bf16/f32)

        if pad > 0:
            # Start of a new sequence: causal zero history.
            @pl.when(lt == 0)
            def _():
                xbuf_ref[0:pad, :] = jnp.zeros((pad, cin), xbuf_ref.dtype)

            # Scratch holds [ history(pad) | current tile(TL) ] in f32.
            xbuf_ref[pl.ds(pad, TL), :] = x.astype(xbuf_ref.dtype)

        b1 = b1_ref[0]                               # (Cout,) f32

        def tap(k):                                  # tap k of the dilated conv
            if k == K - 1:
                return x                             # last tap == current tile
            return xbuf_ref[pl.ds(k * dilation, TL), :].astype(x.dtype)

        if per_tap:
            # Wide-Cin path: K accumulating MXU matmuls, no lane concatenate.
            acc = jnp.dot(tap(K - 1), w_ref[K - 1],
                          preferred_element_type=jnp.float32)
            for k in range(K - 1):
                acc += jnp.dot(tap(k), w_ref[k],
                               preferred_element_type=jnp.float32)
        else:
            # Narrow-Cin path: fuse K taps into one (TL, K*Cin) contraction.
            if K == 1:
                xcat = x
            else:
                taps = [xbuf_ref[pl.ds(k * dilation, TL), :] for k in range(K - 1)]
                taps.append(x.astype(xbuf_ref.dtype))
                xcat = jnp.concatenate(taps, axis=-1).astype(x.dtype)
            acc = jnp.dot(xcat, w_ref[...], preferred_element_type=jnp.float32)

        out = jnp.maximum(acc + b1, 0.0)             # conv1 -> ReLU (dropout = id), f32

        # Residual branch.
        if has_downsample:
            res = jnp.dot(x, wd_ref[...],
                          preferred_element_type=jnp.float32) + bd_ref[0]
        else:
            res = x.astype(jnp.float32)

        out_ref[0] = jnp.maximum(out + res, 0.0).astype(out_ref.dtype)

        if pad > 0:
            # Carry the last `pad` rows as history for the next time tile.
            @pl.when(lt + 1 < pl.num_programs(1))
            def _():
                xbuf_ref[0:pad, :] = xbuf_ref[pl.ds(TL, pad), :]

    return kernel


def _temporal_block_padded(x, w1, b1, wd, bd, dilation, TL):
    """One TemporalBlock on (B, Lp, Cin) with Lp % TL == 0 -> (B, Lp, Cout)."""
    B, L, Cin = x.shape
    K, _, Cout = w1.shape
    pad = (K - 1) * dilation
    assert L % TL == 0 and TL % 8 == 0 and TL >= pad, (L, TL, pad)
    n_lt = L // TL

    has_ds = wd is not None
    # Wide Cin already fills the MXU contraction: skip the lane concatenate.
    per_tap = (K > 1) and (Cin >= 128)
    kernel = _make_temporal_block_kernel(K, dilation, TL, has_ds, per_tap)

    # MXU operands in the activation dtype (bf16 in the default path).
    w_mxu = w1.astype(x.dtype)
    if per_tap:
        w_arg = w_mxu                                          # (K, Cin, Cout)
        w_spec = pl.BlockSpec((K, Cin, Cout), lambda b, l: (0, 0, 0))
    else:
        w_arg = w_mxu.reshape(K * Cin, Cout)                   # stacked taps
        w_spec = pl.BlockSpec((K * Cin, Cout), lambda b, l: (0, 0))
    b1_2d = b1.astype(jnp.float32).reshape(1, Cout)

    in_specs = [
        pl.BlockSpec((1, TL, Cin), lambda b, l: (b, l, 0)),    # x time tile
        w_spec,                                                # conv weights
        pl.BlockSpec((1, Cout), lambda b, l: (0, 0)),          # conv bias (f32)
    ]
    args = [x, w_arg, b1_2d]
    if has_ds:
        in_specs += [
            pl.BlockSpec((Cin, Cout), lambda b, l: (0, 0)),    # 1x1 downsample W
            pl.BlockSpec((1, Cout), lambda b, l: (0, 0)),      # 1x1 downsample b
        ]
        args += [wd.astype(x.dtype), bd.astype(jnp.float32).reshape(1, Cout)]

    return pl.pallas_call(
        kernel,
        out_shape=jax.ShapeDtypeStruct((B, L, Cout), x.dtype),
        grid=(B, n_lt),
        in_specs=in_specs,
        out_specs=pl.BlockSpec((1, TL, Cout), lambda b, l: (b, l, 0)),
        scratch_shapes=[pltpu.VMEM((pad + TL, Cin), jnp.float32)],
        compiler_params=pltpu.CompilerParams(
            dimension_semantics=("parallel", "arbitrary"),
            vmem_limit_bytes=_vmem_limit_bytes(),
        ),
    )(*args)


def temporal_block(x, w1, b1, wd, bd, dilation, *, time_tile=512):
    """One TemporalBlock (standalone).  x: (B, L, Cin) -> (B, L, Cout)."""
    B, L, Cin = x.shape
    pad = (w1.shape[0] - 1) * dilation
    TL = _choose_time_tile(L, pad, time_tile)
    Lp = _round_up(L, TL)
    x_in = x if Lp == L else jnp.pad(x, ((0, 0), (0, Lp - L), (0, 0)))
    out = _temporal_block_padded(x_in, w1, b1, wd, bd, dilation, TL)
    return out if Lp == L else out[:, :L, :]


def init_tcn_params(key, num_inputs, num_channels, kernel_size=2):
    """Deterministic synthetic parameters matching the module's shapes."""
    params = []
    for i, out_ch in enumerate(num_channels):
        in_ch = num_inputs if i == 0 else num_channels[i - 1]
        key, k1, k2, k3, k4 = jax.random.split(key, 5)
        # conv1.weight.data.normal_(0, 0.01); stored tap-major (K, Cin, Cout)
        w1 = 0.01 * jax.random.normal(k1, (kernel_size, in_ch, out_ch), jnp.float32)
        bound1 = 1.0 / jnp.sqrt(in_ch * kernel_size)
        b1 = jax.random.uniform(k2, (out_ch,), jnp.float32, -bound1, bound1)
        if in_ch != out_ch:
            bound_d = 1.0 / jnp.sqrt(float(in_ch))
            wd = jax.random.uniform(k3, (in_ch, out_ch), jnp.float32, -bound_d, bound_d)
            bd = jax.random.uniform(k4, (out_ch,), jnp.float32, -bound_d, bound_d)
        else:
            wd, bd = None, None
        params.append((w1, b1, wd, bd, 2 ** i))
    return params


def temporal_conv_net(x_ncl, params, *, time_tile=512, use_bf16=True):
    """x_ncl: (B, C, L) PyTorch layout -> (B, C_last, L)."""
    out_dtype = x_ncl.dtype
    x = jnp.transpose(x_ncl, (0, 2, 1))              # -> (B, L, C)
    if use_bf16:
        x = x.astype(jnp.bfloat16)                   # bf16 activations end to end
    B, L, _ = x.shape
    max_pad = max((w1.shape[0] - 1) * d for (w1, _, _, _, d) in params)
    TL = _choose_time_tile(L, max_pad, time_tile)
    Lp = _round_up(L, TL)
    if Lp != L:
        # Pad the tail once for the whole stack (causally inert for every
        # layer), so each block keeps a fixed (pad + TL, Cin) scratch.
        x = jnp.pad(x, ((0, 0), (0, Lp - L), (0, 0)))
    for (w1, b1, wd, bd, dilation) in params:
        x = _temporal_block_padded(x, w1, b1, wd, bd, dilation, TL)
    if Lp != L:
        x = x[:, :L, :]
    return jnp.transpose(x, (0, 2, 1)).astype(out_dtype)   # -> (B, C, L)


# --- pure-JAX reference for verification -----------------------------------
def _ref_block(x, w1, b1, wd, bd, dilation):
    B, L, Cin = x.shape
    K, _, Cout = w1.shape
    pad = (K - 1) * dilation
    xpad = jnp.pad(x, ((0, 0), (pad, 0), (0, 0)))
    acc = jnp.zeros((B, L, Cout), jnp.float32)
    for k in range(K):
        acc += jnp.einsum('blc,cd->bld',
                          xpad[:, k * dilation:k * dilation + L, :], w1[k],
                          preferred_element_type=jnp.float32)
    out = jnp.maximum(acc + b1.astype(jnp.float32), 0.0)
    if wd is None:
        res = x.astype(jnp.float32)
    else:
        res = jnp.einsum('blc,cd->bld', x, wd,
                         preferred_element_type=jnp.float32) + bd.astype(jnp.float32)
    return jnp.maximum(out + res, 0.0)


def _ref_tcn(x_ncl, params, use_bf16=True):
    dt = jnp.bfloat16 if use_bf16 else x_ncl.dtype
    x = jnp.transpose(x_ncl, (0, 2, 1)).astype(dt)
    for (w1, b1, wd, bd, d) in params:
        wd_c = None if wd is None else wd.astype(dt)
        x = _ref_block(x, w1.astype(dt), b1, wd_c, bd, d).astype(dt)
    return jnp.transpose(x, (0, 2, 1)).astype(x_ncl.dtype)


if __name__ == "__main__":
    key = jax.random.PRNGKey(0)
    k_x, k_p, k_x2, k_x3, k_p2 = jax.random.split(key, 5)

    # --- small demo matching the module defaults ---------------------------
    B, C_in, L = 2, 4, 16
    num_channels = [8, 8]          # two TemporalBlocks: dilations 1 and 2
    kernel_size = 2

    x = jax.random.normal(k_x, (B, C_in, L), jnp.float32)   # PyTorch NCL layout
    params = init_tcn_params(k_p, C_in, num_channels, kernel_size)

    y = jax.block_until_ready(temporal_conv_net(x, params))
    y_ref = _ref_tcn(x, params)
    assert y.shape == (B, num_channels[-1], L), y.shape
    assert jnp.allclose(y, y_ref, atol=5e-2, rtol=5e-2), \
        float(jnp.max(jnp.abs(y - y_ref)))

    # --- ragged L + history carry across time tiles -------------------------
    L2 = 20                         # not a multiple of the 8-row tile
    x2 = jax.random.normal(k_x2, (B, C_in, L2), jnp.float32)
    y2 = jax.block_until_ready(temporal_conv_net(x2, params, time_tile=8))
    y2_ref = _ref_tcn(x2, params)
    assert y2.shape == (B, num_channels[-1], L2), y2.shape
    assert jnp.allclose(y2, y2_ref, atol=5e-2, rtol=5e-2), \
        float(jnp.max(jnp.abs(y2 - y2_ref)))

    # --- wide-channel path: per-tap MXU matmuls, no downsample --------------
    Cw, Lw = 128, 64
    xw = jax.random.normal(k_x3, (1, Cw, Lw), jnp.float32)
    pw = init_tcn_params(k_p2, Cw, [Cw], kernel_size)
    yw = jax.block_until_ready(temporal_conv_net(xw, pw, time_tile=32))
    yw_ref = _ref_tcn(xw, pw)
    assert yw.shape == (1, Cw, Lw), yw.shape
    assert jnp.allclose(yw, yw_ref, atol=5e-2, rtol=5e-2), \
        float(jnp.max(jnp.abs(yw - yw_ref)))

    print("KERNEL_OK")
</pallas_src>

<mosaic_0001>
module attributes {stable_mosaic.version = 11 : i64} {
  func.func @kernel(%arg0: i32, %arg1: i32, %arg2: memref<1x16x4xbf16, #tpu.memory_space<vmem>>, %arg3: memref<8x8xbf16, #tpu.memory_space<vmem>>, %arg4: memref<1x8xf32, #tpu.memory_space<vmem>>, %arg5: memref<4x8xbf16, #tpu.memory_space<vmem>>, %arg6: memref<1x8xf32, #tpu.memory_space<vmem>>, %arg7: memref<1x16x8xbf16, #tpu.memory_space<vmem>>, %arg8: memref<17x4xf32, #tpu.memory_space<vmem>>) attributes {dimension_semantics = [#tpu.dimension_semantics<parallel>, #tpu.dimension_semantics<arbitrary>], iteration_bounds = array<i64: 2, 1>, scalar_prefetch = 0 : i64, scratch_operands = 1 : i64, tpu.core_type = #tpu.core_type<tc>, window_params = [{transform_indices = @transform_0, window_bounds = array<i64: 1, 16, 4>}, {pipeline_mode = #tpu.pipeline_mode<synchronous>, transform_indices = @transform_1, window_bounds = array<i64: 8, 8>}, {pipeline_mode = #tpu.pipeline_mode<synchronous>, transform_indices = @transform_2, window_bounds = array<i64: 1, 8>}, {pipeline_mode = #tpu.pipeline_mode<synchronous>, transform_indices = @transform_3, window_bounds = array<i64: 4, 8>}, {pipeline_mode = #tpu.pipeline_mode<synchronous>, transform_indices = @transform_4, window_bounds = array<i64: 1, 8>}, {transform_indices = @transform_5, window_bounds = array<i64: 1, 16, 8>}]} {
    %c0 = arith.constant 0 : index
    %c0_0 = arith.constant 0 : index
    %c0_1 = arith.constant 0 : index
    %0 = vector.load %arg2[%c0, %c0_0, %c0_1] : memref<1x16x4xbf16, #tpu.memory_space<vmem>>, vector<1x16x4xbf16>
    %1 = vector.shape_cast %0 : vector<1x16x4xbf16> to vector<16x4xbf16>
    %c0_i32 = arith.constant 0 : i32
    %2 = arith.cmpi eq, %arg1, %c0_i32 : i32
    %3 = arith.extui %2 : i1 to i32
    %c0_i32_2 = arith.constant 0 : i32
    %4 = arith.cmpi ne, %3, %c0_i32_2 : i32
    scf.if %4 {
      %cst_22 = arith.constant 0.000000e+00 : f32
      %38 = vector.broadcast %cst_22 : f32 to vector<1x4xf32>
      %c0_23 = arith.constant 0 : index
      %c0_24 = arith.constant 0 : index
      %39 = vector.load %arg8[%c0_23, %c0_24] : memref<17x4xf32, #tpu.memory_space<vmem>>, vector<1x4xf32>
      tpu.vector_store %arg8[%c0_23, %c0_24], %38 {strides = array<i32>} : memref<17x4xf32, #tpu.memory_space<vmem>>, vector<1x4xf32>,
    } else {
    }
    %5 = arith.extf %1 : vector<16x4xbf16> to vector<16x4xf32>
    %c1 = arith.constant 1 : index
    %c0_3 = arith.constant 0 : index
    %6 = vector.load %arg8[%c1, %c0_3] : memref<17x4xf32, #tpu.memory_space<vmem>>, vector<16x4xf32>
    tpu.vector_store %arg8[%c1, %c0_3], %5 {strides = array<i32>} : memref<17x4xf32, #tpu.memory_space<vmem>>, vector<16x4xf32>,
    %c0_4 = arith.constant 0 : index
    %c0_5 = arith.constant 0 : index
    %7 = vector.load %arg4[%c0_4, %c0_5] : memref<1x8xf32, #tpu.memory_space<vmem>>, vector<1x8xf32>
    %8 = vector.shape_cast %7 : vector<1x8xf32> to vector<8xf32>
    %c0_6 = arith.constant 0 : index
    %c0_7 = arith.constant 0 : index
    %9 = vector.load %arg8[%c0_6, %c0_7] : memref<17x4xf32, #tpu.memory_space<vmem>>, vector<16x4xf32>
    %10 = arith.extf %1 : vector<16x4xbf16> to vector<16x4xf32>
    %11 = tpu.concatenate %9, %10 in 1 : vector<16x4xf32>, vector<16x4xf32> -> vector<16x8xf32>
    %12 = arith.truncf %11 : vector<16x8xf32> to vector<16x8xbf16>
    %c0_8 = arith.constant 0 : index
    %c0_9 = arith.constant 0 : index
    %13 = vector.load %arg3[%c0_8, %c0_9] : memref<8x8xbf16, #tpu.memory_space<vmem>>, vector<8x8xbf16>
    %cst = arith.constant dense<0.000000e+00> : vector<16x8xf32>
    %14 = tpu.matmul %12, %13, %cst {dimension_numbers = #tpu.dot_dimension_numbers<[1], [0], [0], [1], [0, 0, 1, 1], [], []>} : vector<16x8xbf16>, vector<8x8xbf16>, vector<16x8xf32> -> vector<16x8xf32>
    %15 = vector.shape_cast %8 : vector<8xf32> to vector<1x8xf32>
    %16 = vector.broadcast %15 : vector<1x8xf32> to vector<16x8xf32>
    %17 = arith.addf %14, %16 : vector<16x8xf32>
    %cst_10 = arith.constant 0.000000e+00 : f32
    %18 = vector.broadcast %cst_10 : f32 to vector<16x8xf32>
    %19 = arith.maximumf %17, %18 : vector<16x8xf32>
    %c0_11 = arith.constant 0 : index
    %c0_12 = arith.constant 0 : index
    %20 = vector.load %arg5[%c0_11, %c0_12] : memref<4x8xbf16, #tpu.memory_space<vmem>>, vector<4x8xbf16>
    %cst_13 = arith.constant dense<0.000000e+00> : vector<16x8xf32>
    %21 = tpu.matmul %1, %20, %cst_13 {dimension_numbers = #tpu.dot_dimension_numbers<[1], [0], [0], [1], [0, 0, 1, 1], [], []>} : vector<16x4xbf16>, vector<4x8xbf16>, vector<16x8xf32> -> vector<16x8xf32>
    %c0_14 = arith.constant 0 : index
    %c0_15 = arith.constant 0 : index
    %22 = vector.load %arg6[%c0_14, %c0_15] : memref<1x8xf32, #tpu.memory_space<vmem>>, vector<1x8xf32>
    %23 = vector.shape_cast %22 : vector<1x8xf32> to vector<8xf32>
    %24 = vector.shape_cast %23 : vector<8xf32> to vector<1x8xf32>
    %25 = vector.broadcast %24 : vector<1x8xf32> to vector<16x8xf32>
    %26 = arith.addf %21, %25 : vector<16x8xf32>
    %27 = arith.addf %19, %26 : vector<16x8xf32>
    %cst_16 = arith.constant 0.000000e+00 : f32
    %28 = vector.broadcast %cst_16 : f32 to vector<16x8xf32>
    %29 = arith.maximumf %27, %28 : vector<16x8xf32>
    %30 = arith.truncf %29 : vector<16x8xf32> to vector<16x8xbf16>
    %c0_17 = arith.constant 0 : index
    %c0_18 = arith.constant 0 : index
    %c0_19 = arith.constant 0 : index
    %31 = vector.load %arg7[%c0_17, %c0_18, %c0_19] : memref<1x16x8xbf16, #tpu.memory_space<vmem>>, vector<1x16x8xbf16>
    %32 = vector.shape_cast %31 : vector<1x16x8xbf16> to vector<16x8xbf16>
    %33 = vector.shape_cast %30 : vector<16x8xbf16> to vector<1x16x8xbf16>
    tpu.vector_store %arg7[%c0_17, %c0_18, %c0_19], %33 {strides = array<i32>} : memref<1x16x8xbf16, #tpu.memory_space<vmem>>, vector<1x16x8xbf16>,
    %c1_i32 = arith.constant 1 : i32
    %34 = arith.addi %arg1, %c1_i32 : i32
    %c1_i32_20 = arith.constant 1 : i32
    %35 = arith.cmpi slt, %34, %c1_i32_20 : i32
    %36 = arith.extui %35 : i1 to i32
    %c0_i32_21 = arith.constant 0 : i32
    %37 = arith.cmpi ne, %36, %c0_i32_21 : i32
    scf.if %37 {
      %c16 = arith.constant 16 : index
      %c0_22 = arith.constant 0 : index
      %38 = vector.load %arg8[%c16, %c0_22] : memref<17x4xf32, #tpu.memory_space<vmem>>, vector<1x4xf32>
      %c0_23 = arith.constant 0 : index
      %c0_24 = arith.constant 0 : index
      %39 = vector.load %arg8[%c0_23, %c0_24] : memref<17x4xf32, #tpu.memory_space<vmem>>, vector<1x4xf32>
      tpu.vector_store %arg8[%c0_23, %c0_24], %38 {strides = array<i32>} : memref<17x4xf32, #tpu.memory_space<vmem>>, vector<1x4xf32>,
    } else {
    }
    return
  }
  func.func @transform_0(%arg0: i32, %arg1: i32) -> (i32, i32, i32) {
    %c0_i32 = arith.constant 0 : i32
    %c0_i32_0 = arith.constant 0 : i32
    return %arg0, %arg1, %c0_i32 : i32, i32, i32
  }
  func.func @transform_1(%arg0: i32, %arg1: i32) -> (i32, i32) {
    %c0_i32 = arith.constant 0 : i32
    %c0_i32_0 = arith.constant 0 : i32
    %c0_i32_1 = arith.constant 0 : i32
    return %c0_i32, %c0_i32_0 : i32, i32
  }
  func.func @transform_2(%arg0: i32, %arg1: i32) -> (i32, i32) {
    %c0_i32 = arith.constant 0 : i32
    %c0_i32_0 = arith.constant 0 : i32
    %c0_i32_1 = arith.constant 0 : i32
    return %c0_i32, %c0_i32_0 : i32, i32
  }
  func.func @transform_3(%arg0: i32, %arg1: i32) -> (i32, i32) {
    %c0_i32 = arith.constant 0 : i32
    %c0_i32_0 = arith.constant 0 : i32
    %c0_i32_1 = arith.constant 0 : i32
    return %c0_i32, %c0_i32_0 : i32, i32
  }
  func.func @transform_4(%arg0: i32, %arg1: i32) -> (i32, i32) {
    %c0_i32 = arith.constant 0 : i32
    %c0_i32_0 = arith.constant 0 : i32
    %c0_i32_1 = arith.constant 0 : i32
    return %c0_i32, %c0_i32_0 : i32, i32
  }
  func.func @transform_5(%arg0: i32, %arg1: i32) -> (i32, i32, i32) {
    %c0_i32 = arith.constant 0 : i32
    %c0_i32_0 = arith.constant 0 : i32
    return %arg0, %arg1, %c0_i32 : i32, i32, i32
  }
}

</mosaic_0001>

<llo_original>
// kernel: tpu_custom_call.1
$region0: #{tpu_custom_call.1}
  #allocation0 [shape = 'u32[]', space=smem, size = 0x4, offset = 0x4, fixed_abs, tag = 'smem constant byte address 0x4 - core index']
  #allocation1 [shape = 'u32[144,128]{1,0:T(1,128)}', space=vmem, size = 0x12000, scoped, tag = 'internal scratch']
  #allocation2 [shape = 'f32[17,4]{1,0:T(8,128)}', space=vmem, size = 0x3000, scoped, tag = 'scratch operand']
  %s0 = inlined_call_operand.vmem [shape: bf16[2,16,4], index: 0, kind: input, shape index: {}]
  %s1 = inlined_call_operand.vmem [shape: bf16[8,8], index: 1, kind: input, shape index: {}]
  %s2 = inlined_call_operand.vmem [shape: f32[1,8], index: 2, kind: input, shape index: {}]
  %s3 = inlined_call_operand.vmem [shape: bf16[4,8], index: 3, kind: input, shape index: {}]
  %s4 = inlined_call_operand.vmem [shape: f32[1,8], index: 4, kind: input, shape index: {}]
  %s5 = inlined_call_operand.vmem [shape: bf16[2,16,8], index: 5, kind: output, shape index: {}]
  %s6 = sld [smem:[#allocation0]]
  $region61: #{tpu_custom_call.1} parent=0
    _
  %s8 = ssub.s32 1, %s6
  %s9 = scalar_select 0, %s8, %s6
  loop: start=0, step=1, limit=4
  $region2: #{tpu_custom_call.1} parent=0 // loop_pre_header
    _
  $region3: #{tpu_custom_call.1} parent=0 // loop_header
    %s11 = sphi 0, %s15
    %p12 = scmp.ge.s32.totalorder %s11, 4
    %s18 = sphi 0, %s30
    %s19 = sphi 0, %s26
    %s20 = sphi 0, %s18
    %s21 = sphi 0, %s19
    %s22 = sphi 0, %s20
    %s23 = sphi 0, %s21
    %s35 = sphi 0, %s37
    %s38 = sphi 0, %s35
    %s39 = sphi 0, %s38
    %s55 = sphi 0, %s39
    %s59 = sphi 0, %s59
    %s61 = sphi 0, %s59
    %s62 = sphi 0, %s61
    %s76 = sphi 0, %s62
    %s80 = sphi 0, %s80
    %s82 = sphi 0, %s80
    %s83 = sphi 0, %s82
    %s97 = sphi 0, %s83
    %s101 = sphi 0, %s101
    %s103 = sphi 0, %s101
    %s104 = sphi 0, %s103
    %s118 = sphi 0, %s104
    %s122 = sphi 0, %s122
    %s124 = sphi 0, %s122
    %s125 = sphi 0, %s124
    %s139 = sphi 0, %s125
    %s147 = sphi 0, %s149
    %s150 = sphi 0, %s147
    %s151 = sphi 0, %s150
    %s167 = sphi 0, %s151
  $region4: #{tpu_custom_call.1} parent=0 // loop_header_branch
    %14 = sbr.rel (%p12) target = $region8
  $region5: #{tpu_custom_call.1} parent=0 // loop_body
    %s16 = ssub.s32 %s11, 1
    %s17 = ssub.s32 %s11, 2
    %s24 = sadd.s32 1, %s19
    %p25 = scmp.ge.s32.totalorder %s24, 1
    %s26 = scalar_select %p25, 0, %s24
    %s27 = sadd.s32 1, %s18
    %s28 = scalar_select %p25, %s27, %s18
    %p29 = scmp.ge.s32.totalorder %s28, 2
    %s30 = scalar_select %p29, 0, %s28
    %s31 = ssub.s32 %s18, %s30
    %s32 = ssub.s32 %s19, %s26
    %s33 = sor.u32 %s31, %s32
    %p34 = scmp.eq.s32.totalorder %s33, 0
    %s36 = sadd.s32 %s35, 1
    %s37 = scalar_select %p34, %s35, %s36
    %p40 = pneg %p34
    %p41 = scmp.eq.s32.totalorder %s11, 1
    %p42 = por %p40, %p41
    %p43 = scmp.ne.s32.totalorder %s35, %s38
    %p44 = scmp.eq.s32.totalorder %s11, 0
    %p45 = por %p43, %p44
    %p46 = scmp.ne.s32.totalorder %s35, %s38
    %p47 = scmp.eq.s32.totalorder %s16, 1
    %p48 = por %p46, %p47
    %p49 = scmp.ne.s32.totalorder %s38, %s39
    %p50 = scmp.eq.s32.totalorder %s16, 0
    %p51 = por %p49, %p50
    %p52 = scmp.ne.s32.totalorder %s38, %s39
    %p53 = scmp.eq.s32.totalorder %s17, 1
    %p54 = por %p52, %p53
    %p56 = scmp.ne.s32.totalorder %s39, %s55
    %p57 = scmp.eq.s32.totalorder %s17, 0
    %p58 = por %p56, %p57
    %s60 = sadd.s32 %s59, 1
    %p63 = scmp.eq.s32.totalorder %s11, 1
    %p64 = scmp.ne.s32.totalorder %s59, %s61
    %p65 = scmp.eq.s32.totalorder %s11, 0
    %p66 = por %p64, %p65
    %p67 = scmp.ne.s32.totalorder %s59, %s61
    %p68 = scmp.eq.s32.totalorder %s16, 1
    %p69 = por %p67, %p68
    %p70 = scmp.ne.s32.totalorder %s61, %s62
    %p71 = scmp.eq.s32.totalorder %s16, 0
    %p72 = por %p70, %p71
    %p73 = scmp.ne.s32.totalorder %s61, %s62
    %p74 = scmp.eq.s32.totalorder %s17, 1
    %p75 = por %p73, %p74
    %p77 = scmp.ne.s32.totalorder %s62, %s76
    %p78 = scmp.eq.s32.totalorder %s17, 0
    %p79 = por %p77, %p78
    %s81 = sadd.s32 %s80, 1
    %p84 = scmp.eq.s32.totalorder %s11, 1
    %p85 = scmp.ne.s32.totalorder %s80, %s82
    %p86 = scmp.eq.s32.totalorder %s11, 0
    %p87 = por %p85, %p86
    %p88 = scmp.ne.s32.totalorder %s80, %s82
    %p89 = scmp.eq.s32.totalorder %s16, 1
    %p90 = por %p88, %p89
    %p91 = scmp.ne.s32.totalorder %s82, %s83
    %p92 = scmp.eq.s32.totalorder %s16, 0
    %p93 = por %p91, %p92
    %p94 = scmp.ne.s32.totalorder %s82, %s83
    %p95 = scmp.eq.s32.totalorder %s17, 1
    %p96 = por %p94, %p95
    %p98 = scmp.ne.s32.totalorder %s83, %s97
    %p99 = scmp.eq.s32.totalorder %s17, 0
    %p100 = por %p98, %p99
    %s102 = sadd.s32 %s101, 1
    %p105 = scmp.eq.s32.totalorder %s11, 1
    %p106 = scmp.ne.s32.totalorder %s101, %s103
    %p107 = scmp.eq.s32.totalorder %s11, 0
    %p108 = por %p106, %p107
    %p109 = scmp.ne.s32.totalorder %s101, %s103
    %p110 = scmp.eq.s32.totalorder %s16, 1
    %p111 = por %p109, %p110
    %p112 = scmp.ne.s32.totalorder %s103, %s104
    %p113 = scmp.eq.s32.totalorder %s16, 0
    %p114 = por %p112, %p113
    %p115 = scmp.ne.s32.totalorder %s103, %s104
    %p116 = scmp.eq.s32.totalorder %s17, 1
    %p117 = por %p115, %p116
    %p119 = scmp.ne.s32.totalorder %s104, %s118
    %p120 = scmp.eq.s32.totalorder %s17, 0
    %p121 = por %p119, %p120
    %s123 = sadd.s32 %s122, 1
    %p126 = scmp.eq.s32.totalorder %s11, 1
    %p127 = scmp.ne.s32.totalorder %s122, %s124
    %p128 = scmp.eq.s32.totalorder %s11, 0
    %p129 = por %p127, %p128
    %p130 = scmp.ne.s32.totalorder %s122, %s124
    %p131 = scmp.eq.s32.totalorder %s16, 1
    %p132 = por %p130, %p131
    %p133 = scmp.ne.s32.totalorder %s124, %s125
    %p134 = scmp.eq.s32.totalorder %s16, 0
    %p135 = por %p133, %p134
    %p136 = scmp.ne.s32.totalorder %s124, %s125
    %p137 = scmp.eq.s32.totalorder %s17, 1
    %p138 = por %p136, %p137
    %p140 = scmp.ne.s32.totalorder %s125, %s139
    %p141 = scmp.eq.s32.totalorder %s17, 0
    %p142 = por %p140, %p141
    %s143 = ssub.s32 %s18, %s30
    %s144 = ssub.s32 %s19, %s26
    %s145 = sor.u32 %s143, %s144
    %p146 = scmp.eq.s32.totalorder %s145, 0
    %s148 = sadd.s32 %s147, 1
    %s149 = scalar_select %p146, %s147, %s148
    %p152 = pneg %p146
    %p153 = scmp.eq.s32.totalorder %s11, 1
    %p154 = por %p152, %p153
    %p155 = scmp.ne.s32.totalorder %s147, %s150
    %p156 = scmp.eq.s32.totalorder %s11, 0
    %p157 = por %p155, %p156
    %p158 = scmp.ne.s32.totalorder %s147, %s150
    %p159 = scmp.eq.s32.totalorder %s16, 1
    %p160 = por %p158, %p159
    %p161 = scmp.ne.s32.totalorder %s150, %s151
    %p162 = scmp.eq.s32.totalorder %s16, 0
    %p163 = por %p161, %p162
    %p164 = scmp.ne.s32.totalorder %s150, %s151
    %p165 = scmp.eq.s32.totalorder %s17, 1
    %p166 = por %p164, %p165
    %p168 = scmp.ne.s32.totalorder %s151, %s167
    %p169 = scmp.eq.s32.totalorder %s17, 0
    %p170 = por %p168, %p169
    %p171 = scmp.le.s32.totalorder 1, %s11
    %p172 = scmp.lt.s32.totalorder %s11, 3
    %p173 = pnand %p171, %p172
    %p174 = pneg %p173
    // Predicated region
    $region9: #{tpu_custom_call.1} parent=5 // pred_check
      _
    $region10: #{tpu_custom_call.1} parent=5 // pred_check_branch
      %176 = sbr.rel (%p173) target = $region12
    $region11: #{tpu_custom_call.1} parent=5 // pred_region
      %s177 = ssub.s32 %s11, 1
      // Predicated region
      $region13: #{tpu_custom_call.1} parent=11 // pred_check
        %p178 = pneg %p72
      $region14: #{tpu_custom_call.1} parent=11 // pred_check_branch
        %180 = sbr.rel (%p178) target = $region16
      $region15: #{tpu_custom_call.1} parent=11 // pred_region
        _
      $region16: #{tpu_custom_call.1} parent=11 // pred_fallthru
        _
      // Predicated region
      $region17: #{tpu_custom_call.1} parent=11 // pred_check
        %p181 = pneg %p93
      $region18: #{tpu_custom_call.1} parent=11 // pred_check_branch
        %183 = sbr.rel (%p181) target = $region20
      $region19: #{tpu_custom_call.1} parent=11 // pred_region
        _
      $region20: #{tpu_custom_call.1} parent=11 // pred_fallthru
        _
      // Predicated region
      $region21: #{tpu_custom_call.1} parent=11 // pred_check
        %p184 = pneg %p114
      $region22: #{tpu_custom_call.1} parent=11 // pred_check_branch
        %186 = sbr.rel (%p184) target = $region24
      $region23: #{tpu_custom_call.1} parent=11 // pred_region
        _
      $region24: #{tpu_custom_call.1} parent=11 // pred_fallthru
        _
      // Predicated region
      $region25: #{tpu_custom_call.1} parent=11 // pred_check
        %p187 = pneg %p135
      $region26: #{tpu_custom_call.1} parent=11 // pred_check_branch
        %189 = sbr.rel (%p187) target = $region28
      $region27: #{tpu_custom_call.1} parent=11 // pred_region
        _
      $region28: #{tpu_custom_call.1} parent=11 // pred_fallthru
        _
    $region12: #{tpu_custom_call.1} parent=5 // pred_fallthru
      _
    %p190 = scmp.lt.s32.totalorder %s11, 2
    // Predicated region
    $region29: #{tpu_custom_call.1} parent=5 // pred_check
      %p191 = pneg %p190
    $region30: #{tpu_custom_call.1} parent=5 // pred_check_branch
      %193 = sbr.rel (%p191) target = $region32
    $region31: #{tpu_custom_call.1} parent=5 // pred_region
      // Predicated region
      $region33: #{tpu_custom_call.1} parent=31 // pred_check
        %p194 = pneg %p45
      $region34: #{tpu_custom_call.1} parent=31 // pred_check_branch
        %196 = sbr.rel (%p194) target = $region36
      $region35: #{tpu_custom_call.1} parent=31 // pred_region
        %s197 = smul.u32 2, %s19
        %p198 = scmp.lt.s32.totalorder %s18, 1
        %s199 = scalar_select %p198, %s18, 1
        %p200 = scmp.lt.s32.totalorder %s197, 1
        %s201 = scalar_select %p200, %s197, 1
        %s202 = smul.addr %s199, 2
        %s203 = sadd.s32 %s201, %s202
        %s204 = smul.addr %s203, 4
        %s205 = scalar_lea.vmem %s0, %s204
        %s206 = smul.u32 2, %s19
      $region36: #{tpu_custom_call.1} parent=31 // pred_fallthru
        _
    $region32: #{tpu_custom_call.1} parent=5 // pred_fallthru
      _
    %p207 = scmp.le.s32.totalorder 1, %s11
    %p208 = scmp.lt.s32.totalorder %s11, 3
    %p209 = pnand %p207, %p208
    %p210 = pneg %p209
    // Predicated region
    $region37: #{tpu_custom_call.1} parent=5 // pred_check
      _
    $region38: #{tpu_custom_call.1} parent=5 // pred_check_branch
      %212 = sbr.rel (%p209) target = $region40
    $region39: #{tpu_custom_call.1} parent=5 // pred_region
      %s213 = ssub.s32 %s11, 1
      %s214 = smul.u32 2, %s21
      %p215 = scmp.lt.s32.totalorder %s20, 1
      %s216 = scalar_select %p215, %s20, 1
      %p217 = scmp.lt.s32.totalorder %s214, 1
      %s218 = scalar_select %p217, %s214, 1
      %s219 = smul.addr %s216, 2
      %s220 = sadd.s32 %s218, %s219
      %s221 = smul.addr %s220, 4
      %s222 = scalar_lea.vmem %s0, %s221
      %p223 = pneg %p51
      %p224 = pneg %p48
      %p225 = pneg %p72
      %p226 = pneg %p69
      %p227 = pneg %p93
      %p228 = pneg %p90
      %p229 = pneg %p114
      %p230 = pneg %p111
      %p231 = pneg %p135
      %p232 = pneg %p132
      %p233 = pneg %p163
      %p234 = pneg %p160
      %s235 = smul.u32 2, %s21
      %p236 = scmp.lt.s32.totalorder %s20, 1
      %s237 = scalar_select %p236, %s20, 1
      %p238 = scmp.lt.s32.totalorder %s235, 1
      %s239 = scalar_select %p238, %s235, 1
      %s240 = smul.addr %s237, 2
      %s241 = sadd.s32 %s239, %s240
      %s242 = smul.addr %s241, 4
      %s243 = scalar_lea.vmem %s5, %s242
      %s244 = smul.u32 2, %s21
      %p245 = scmp.lt.s32.totalorder %s20, 1
      %s246 = scalar_select %p245, %s20, 1
      %p247 = scmp.lt.s32.totalorder %s244, 1
      %s248 = scalar_select %p247, %s244, 1
      %s249 = smul.addr %s246, 2
      %s250 = sadd.s32 %s248, %s249
      %s251 = smul.addr %s250, 4
      %s252 = scalar_lea.vmem %s0, %s251
      %s253 = smul.u32 2, %s21
      %s254 = smul.u32 2, %s21
      %p255 = scmp.lt.s32.totalorder %s20, 1
      %s256 = scalar_select %p255, %s20, 1
      %p257 = scmp.lt.s32.totalorder %s254, 1
      %s258 = scalar_select %p257, %s254, 1
      %s259 = smul.addr %s256, 2
      %s260 = sadd.s32 %s258, %s259
      %s261 = smul.addr %s260, 4
      %s262 = scalar_lea.vmem %s5, %s261
      %s263 = smul.u32 2, %s21
      %v265 = vld [vmem:[%s252] sm:$0xf]
      %v266 = vld [vmem:[%s252 + $0x4] sm:$0xf]
      %p267 = scmp.eq.s32.totalorder %s21, 0
      // Predicated region
      $region41: #{tpu_custom_call.1} parent=39 // pred_check
        %p268 = pneg %p267
      $region42: #{tpu_custom_call.1} parent=39 // pred_check_branch
        %270 = sbr.rel (%p268) target = $region44
      $region43: #{tpu_custom_call.1} parent=39 // pred_region
        %vm271 = vcmask 24576
        %272 = vst.msk [vmem:[#allocation2] sm:$0x1] %vm271, 0.0
      $region44: #{tpu_custom_call.1} parent=39 // pred_fallthru
        _
      %v273 = vunpack.c.l.bf16 %v265
      %v274 = vunpack.c.l.bf16 %v266
      %vm275 = vcmask 31744
      %276 = vst.msk [vmem:[#allocation2 + $0x1] sm:$0xff] %vm275, %v273
      %277 = vst.msk [vmem:[#allocation2 + $0x9] sm:$0xff] %vm275, %v274
      %v278 = vld [vmem:[%s2] sm:$0x1]
      %v279 = vld [vmem:[#allocation2] sm:$0xff]
      %v280 = vld [vmem:[#allocation2 + $0x8] sm:$0xff]
      %283 = vrot.lane.b32.xlu0 %v273, 4
      %v284 = vpop.permute.xlu0 %283
      %285 = vrot.lane.b32.xlu0 %v274, 4
      %v286 = vpop.permute.xlu0 %285
      %v289 = vsel %vm275, %v279, %v284
      %v290 = vsel %vm275, %v280, %v286
      %v291 = vpack.c.bf16 %v290, %v289
      %v292 = vld [vmem:[%s1] sm:$0xf]
      %v294 = vlaneseq
      %v295 = vshrl.u32 %v294, 7
      %v296 = vsub.s32 0, %v295
      %v297 = vrot.slane %v278, %v296
      %vm299 = vcmask 64512
      %v301 = vsel %vm299, %v291, 0
      %vm303 = vcmask 1043456
      %v305 = vsel %vm303, %v292, 0
      %307 = vmatprep.subr.bf16.mxu0 0
      %308 = vmatpush1.bf16.msra.mxu0 0
      %309 = vmatprep.subr.bf16.mxu0 0
      %310 = vmatpush1.bf16.msra.mxu0 0
      %311 = vmatprep.subr.bf16.mxu0 0
      %312 = vmatpush1.bf16.msra.mxu0 0
      %313 = vmatprep.subr.bf16.mxu0 0
      %314 = vmatpush1.bf16.msra.mxu0 0
      %315 = vmatprep.subr.bf16.mxu0 0
      %316 = vmatpush1.bf16.msra.mxu0 0
      %317 = vmatprep.subr.bf16.mxu0 0
      %318 = vmatpush1.bf16.msra.mxu0 0
      %319 = vmatprep.subr.bf16.mxu0 0
      %320 = vmatpush1.bf16.msra.mxu0 0
      %321 = vmatprep.subr.bf16.mxu0 0
      %322 = vmatpush1.bf16.msra.mxu0 %v305
      %323 = vmatprep.subr.bf16.mxu0 0
      %324 = vmatpush2.bf16.msra.mxu0 0
      %325 = vmatprep.subr.bf16.mxu0 0
      %326 = vmatpush2.bf16.msra.mxu0 0
      %327 = vmatprep.subr.bf16.mxu0 0
      %328 = vmatpush2.bf16.msra.mxu0 0
      %329 = vmatprep.subr.bf16.mxu0 0
      %330 = vmatpush2.bf16.msra.mxu0 0
      %331 = vmatprep.subr.bf16.mxu0 0
      %332 = vmatpush2.bf16.msra.mxu0 0
      %333 = vmatprep.subr.bf16.mxu0 0
      %334 = vmatpush2.bf16.msra.mxu0 0
      %335 = vmatprep.subr.bf16.mxu0 0
      %336 = vmatpush2.bf16.msra.mxu0 0
      %337 = vmatprep.subr.bf16.mxu0 0
      %338 = vmatpush2.bf16.msra.mxu0 0
      %339 = vmatprep.mubr.bf16.mxu0 0
      %340 = vmatmul.mubr.bf16.gmra.mxu0 %v301
      %v341 = vpop.f32.mrf.mxu0
      %v342 = vadd.f32 %v297, %v341
      %v343 = vpop.f32.mrf.mxu0
      %v344 = vpop.f32.mrf.mxu0
      %v345 = vadd.f32 %v297, %v344
      %v346 = vpop.f32.mrf.mxu0
      %347 = vdwg.mxu0
      %v348 = vmax.f32 %v342, 0.0
      %v349 = vmax.f32 %v345, 0.0
      %v350 = vld [vmem:[%s3] sm:$0x3]
      %v351 = vld [vmem:[%s4] sm:$0x1]
      %v353 = vlaneseq
      %v354 = vshrl.u32 %v353, 7
      %v355 = vsub.s32 0, %v354
      %v356 = vrot.slane %v351, %v355
      %v360 = vunpack.c.l.b16 %v265
      %v361 = vunpack.c.l.b16 %v266
      %v362 = vpack.c.b16 %v361, %v360
      %v364 = vsel %vm275, %v362, 0
      %vm366 = vcmask 1041408
      %v368 = vsel %vm366, %v350, 0
      %370 = vmatprep.subr.bf16.mxu0 0
      %371 = vmatpush1.bf16.msra.mxu0 0
      %372 = vmatprep.subr.bf16.mxu0 0
      %373 = vmatpush1.bf16.msra.mxu0 0
      %374 = vmatprep.subr.bf16.mxu0 0
      %375 = vmatpush1.bf16.msra.mxu0 0
      %376 = vmatprep.subr.bf16.mxu0 0
      %377 = vmatpush1.bf16.msra.mxu0 0
      %378 = vmatprep.subr.bf16.mxu0 0
      %379 = vmatpush1.bf16.msra.mxu0 0
      %380 = vmatprep.subr.bf16.mxu0 0
      %381 = vmatpush1.bf16.msra.mxu0 0
      %382 = vmatprep.subr.bf16.mxu0 0
      %383 = vmatpush1.bf16.msra.mxu0 0
      %384 = vmatprep.subr.bf16.mxu0 0
      %385 = vmatpush1.bf16.msra.mxu0 %v368
      %386 = vmatprep.subr.bf16.mxu0 0
      %387 = vmatpush2.bf16.msra.mxu0 0
      %388 = vmatprep.subr.bf16.mxu0 0
      %389 = vmatpush2.bf16.msra.mxu0 0
      %390 = vmatprep.subr.bf16.mxu0 0
      %391 = vmatpush2.bf16.msra.mxu0 0
      %392 = vmatprep.subr.bf16.mxu0 0
      %393 = vmatpush2.bf16.msra.mxu0 0
      %394 = vmatprep.subr.bf16.mxu0 0
      %395 = vmatpush2.bf16.msra.mxu0 0
      %396 = vmatprep.subr.bf16.mxu0 0
      %397 = vmatpush2.bf16.msra.mxu0 0
      %398 = vmatprep.subr.bf16.mxu0 0
      %399 = vmatpush2.bf16.msra.mxu0 0
      %400 = vmatprep.subr.bf16.mxu0 0
      %401 = vmatpush2.bf16.msra.mxu0 0
      %402 = vmatprep.mubr.bf16.mxu0 0
      %403 = vmatmul.mubr.bf16.gmra.mxu0 %v364
      %v404 = vpop.f32.mrf.mxu0
      %v405 = vadd.f32 %v356, %v404
      %v406 = vpop.f32.mrf.mxu0
      %v407 = vpop.f32.mrf.mxu0
      %v408 = vadd.f32 %v356, %v407
      %v409 = vpop.f32.mrf.mxu0
      %410 = vdwg.mxu0
      %v411 = vadd.f32 %v348, %v405
      %v412 = vadd.f32 %v349, %v408
      %v413 = vmax.f32 %v411, 0.0
      %v414 = vmax.f32 %v412, 0.0
      %v415 = vpack.c.bf16 %v414, %v413
      %v417 = vunpack.c.l.b16 %v415
      %v418 = vunpack.c.h.b16 %v415
      %v419 = vpack.c.b16 %v417, %v417
      %v420 = vpack.c.b16 %v418, %v418
      %vm423 = vcmask 60416
      %424 = vst.msk [vmem:[%s262] sm:$0xf] %vm423, %v419
      %425 = vst.msk [vmem:[%s262 + $0x4] sm:$0xf] %vm423, %v420
      %s426 = sadd.s32 %s21, 1
      %p427 = scmp.lt.s32.totalorder %s426, 1
      // Predicated region
      $region45: #{tpu_custom_call.1} parent=39 // pred_check
        %p428 = pneg %p427
      $region46: #{tpu_custom_call.1} parent=39 // pred_check_branch
        %430 = sbr.rel (%p428) target = $region48
      $region47: #{tpu_custom_call.1} parent=39 // pred_region
        %v431 = vld [vmem:[#allocation2 + $0x10] sm:$0x1]
        %vm432 = vcmask 24576
        %433 = vst.msk [vmem:[#allocation2] sm:$0x1] %vm432, %v431
      $region48: #{tpu_custom_call.1} parent=39 // pred_fallthru
        _
      %s434 = smul.u32 2, %s21
      %p435 = scmp.lt.s32.totalorder %s20, 1
      %s436 = scalar_select %p435, %s20, 1
      %p437 = scmp.lt.s32.totalorder %s434, 1
      %s438 = scalar_select %p437, %s434, 1
      %s439 = smul.addr %s436, 2
      %s440 = sadd.s32 %s438, %s439
      %s441 = smul.addr %s440, 4
      %s442 = scalar_lea.vmem %s5, %s441
      // Predicated region
      $region49: #{tpu_custom_call.1} parent=39 // pred_check
        %p443 = pneg %p160
      $region50: #{tpu_custom_call.1} parent=39 // pred_check_branch
        %445 = sbr.rel (%p443) target = $region52
      $region51: #{tpu_custom_call.1} parent=39 // pred_region
        %s446 = smul.u32 2, %s21
      $region52: #{tpu_custom_call.1} parent=39 // pred_fallthru
        _
    $region40: #{tpu_custom_call.1} parent=5 // pred_fallthru
      _
    %p447 = scmp.le.s32.totalorder 2, %s11
    // Predicated region
    $region53: #{tpu_custom_call.1} parent=5 // pred_check
      %p448 = pneg %p447
    $region54: #{tpu_custom_call.1} parent=5 // pred_check_branch
      %450 = sbr.rel (%p448) target = $region56
    $region55: #{tpu_custom_call.1} parent=5 // pred_region
      %s451 = ssub.s32 %s11, 2
      // Predicated region
      $region57: #{tpu_custom_call.1} parent=55 // pred_check
        %p452 = pneg %p166
      $region58: #{tpu_custom_call.1} parent=55 // pred_check_branch
        %454 = sbr.rel (%p452) target = $region60
      $region59: #{tpu_custom_call.1} parent=55 // pred_region
        %s455 = smul.u32 2, %s23
        %p456 = scmp.lt.s32.totalorder %s22, 1
        %s457 = scalar_select %p456, %s22, 1
        %p458 = scmp.lt.s32.totalorder %s455, 1
        %s459 = scalar_select %p458, %s455, 1
        %s460 = smul.addr %s457, 2
        %s461 = sadd.s32 %s459, %s460
        %s462 = smul.addr %s461, 4
        %s463 = scalar_lea.vmem %s5, %s462
      $region60: #{tpu_custom_call.1} parent=55 // pred_fallthru
        _
    $region56: #{tpu_custom_call.1} parent=5 // pred_fallthru
      _
  $region6: #{tpu_custom_call.1} parent=0 // loop_footer
    %s15 = sadd.s32 1, %s11
  $region7: #{tpu_custom_call.1} parent=0 // loop_footer_branch
    %10 = sbr.rel target = $region3
  $region8: #{tpu_custom_call.1} parent=0 // loop_exit
    _

</llo_original>
